<compile_context>
chip_gen: v6e
topology: v6e:2x2x1
jax: 0.10.0
libtpu: 0.0.40
codegen_flags: <defaults>
</compile_context>

<pallas_src>
import jax
import jax.numpy as jnp
from jax.experimental import pallas as pl
from jax.experimental.pallas import tpu as pltpu

IN_FEATURES = 3
OUT_FEATURES = 10
PAD_OUT = 16            # out-features padded to a multiple of 8 sublanes
CLAMP_MIN = 0.5
CLAMP_MAX = 0.75

TM_MAX = 16384          # rows of the original problem per grid step


def _round_up(x, m):
    return ((x + m - 1) // m) * m


def _linear_clamp_kernel(w_ref, b_ref, x_ref, o_ref):
    # w_ref: (16, 3) VMEM   b_ref: (16, 1) VMEM   (rows 10..15 are zero pad)
    # x_ref: (3, tm) VMEM   o_ref: (tm, 10) VMEM  (native output layout)
    x = x_ref[...]                       # (3, tm)
    w = w_ref[...]                       # (16, 3)
    acc = b_ref[...]                     # (16, 1), broadcasts over lanes
    # 3 broadcast multiply-adds on the VPU instead of an MXU matmul
    # (K=3, N=10 would leave the systolic array ~99% idle).  Exact f32.
    for k in range(IN_FEATURES):
        acc = acc + w[:, k:k + 1] * x[k:k + 1, :]   # (16,1)*(1,tm) -> (16,tm)
    # Clamp while still in the compact (16, tm) layout (fewer vregs).
    acc = jnp.minimum(jnp.maximum(acc, CLAMP_MIN), CLAMP_MAX)
    # (16, tm) -> (tm, 16) on the XLU (hidden under the output DMA), drop the
    # 6 zero-pad rows and store the natively-laid-out (tm, 10) tile.
    o_ref[...] = jnp.transpose(acc)[:, :OUT_FEATURES].astype(o_ref.dtype)


def linear_clamp(x, weight, bias):
    """x: (..., 3) float32; weight: (10, 3); bias: (10,). Returns (..., 10)."""
    assert x.shape[-1] == IN_FEATURES
    lead_shape = x.shape[:-1]
    m = 1
    for d in lead_shape:
        m *= d

    # Input transpose in the wrapper so M sits on the 128-wide lane axis
    # inside the kernel.  (Output side needs no wrapper transpose/slice.)
    xT = x.reshape(m, IN_FEATURES).T                       # (3, M)

    # Tile selection: amortize the ~0.35us per-step overhead with big tiles,
    # keep the double-buffered (tm,128)-lane-padded output tiles well inside
    # VMEM on every generation (v7x has 64 MiB/TC), and give v7x's two
    # TensorCores >=2 grid steps when there is enough work to split.
    n_blocks = pl.cdiv(m, TM_MAX)
    if m >= 4096:
        n_blocks = max(n_blocks, 2)
    tm = min(_round_up(pl.cdiv(m, n_blocks), 128), TM_MAX)
    grid = (pl.cdiv(m, tm),)            # partial edge block is clipped by Pallas

    # Zero-pad weights/bias to 16 output rows so the in-kernel transpose is
    # sublane-aligned; the pad rows are sliced off before the store.
    w = jnp.zeros((PAD_OUT, IN_FEATURES), jnp.float32)
    w = w.at[:OUT_FEATURES].set(weight.astype(jnp.float32))
    b = jnp.zeros((PAD_OUT, 1), jnp.float32)
    b = b.at[:OUT_FEATURES, 0].set(bias.astype(jnp.float32))

    out2d = pl.pallas_call(
        _linear_clamp_kernel,
        out_shape=jax.ShapeDtypeStruct((m, OUT_FEATURES), x.dtype),
        grid=grid,
        in_specs=[
            pl.BlockSpec((PAD_OUT, IN_FEATURES), lambda i: (0, 0)),  # resident
            pl.BlockSpec((PAD_OUT, 1), lambda i: (0, 0)),            # resident
            pl.BlockSpec((IN_FEATURES, tm), lambda i: (0, i)),
        ],
        out_specs=pl.BlockSpec((tm, OUT_FEATURES), lambda i: (i, 0)),
        compiler_params=pltpu.CompilerParams(
            dimension_semantics=("parallel",),
            vmem_limit_bytes=48 * 1024 * 1024,
        ),
        cost_estimate=pl.CostEstimate(
            flops=2 * IN_FEATURES * OUT_FEATURES * m,
            transcendentals=0,
            bytes_accessed=4 * (IN_FEATURES + OUT_FEATURES) * m,
        ),
    )(w, b, xT)

    return out2d.reshape(*lead_shape, OUT_FEATURES)


if __name__ == "__main__":
    key = jax.random.PRNGKey(0)
    kx, kw, kb = jax.random.split(key, 3)

    # Deterministic parameter init (shapes from torch.nn.Linear(3, 10)).
    bound = 1.0 / (IN_FEATURES ** 0.5)
    weight = jax.random.uniform(kw, (OUT_FEATURES, IN_FEATURES),
                                jnp.float32, -bound, bound)
    bias = jax.random.uniform(kb, (OUT_FEATURES,), jnp.float32, -bound, bound)

    # Small input consistent with Linear(3, 10): last dim = 3.
    x = jax.random.normal(kx, (2, 8, 16, IN_FEATURES), jnp.float32)

    out = linear_clamp(x, weight, bias)
    jax.block_until_ready(out)

    # Reference check in plain JAX.
    ref = jnp.clip(x @ weight.T + bias, CLAMP_MIN, CLAMP_MAX)
    assert out.shape == (2, 8, 16, OUT_FEATURES)
    assert jnp.allclose(out, ref, atol=1e-5, rtol=1e-5)

    print("KERNEL_OK")
</pallas_src>

<mosaic_0001>
module attributes {stable_mosaic.version = 11 : i64} {
  func.func @_linear_clamp_kernel(%arg0: i32, %arg1: memref<16x3xf32, #tpu.memory_space<vmem>>, %arg2: memref<16x1xf32, #tpu.memory_space<vmem>>, %arg3: memref<3x256xf32, #tpu.memory_space<vmem>>, %arg4: memref<256x10xf32, #tpu.memory_space<vmem>>) attributes {dimension_semantics = [#tpu.dimension_semantics<parallel>], iteration_bounds = array<i64: 1>, scalar_prefetch = 0 : i64, scratch_operands = 0 : i64, tpu.core_type = #tpu.core_type<tc>, window_params = [{pipeline_mode = #tpu.pipeline_mode<synchronous>, transform_indices = @transform_0, window_bounds = array<i64: 16, 3>}, {pipeline_mode = #tpu.pipeline_mode<synchronous>, transform_indices = @transform_1, window_bounds = array<i64: 16, 1>}, {transform_indices = @transform_2, window_bounds = array<i64: 3, 256>}, {transform_indices = @transform_3, window_bounds = array<i64: 256, 10>}]} {
    %c0 = arith.constant 0 : index
    %c0_0 = arith.constant 0 : index
    %0 = vector.load %arg3[%c0, %c0_0] : memref<3x256xf32, #tpu.memory_space<vmem>>, vector<3x256xf32>
    %c0_1 = arith.constant 0 : index
    %c0_2 = arith.constant 0 : index
    %1 = vector.load %arg1[%c0_1, %c0_2] : memref<16x3xf32, #tpu.memory_space<vmem>>, vector<16x3xf32>
    %c0_3 = arith.constant 0 : index
    %c0_4 = arith.constant 0 : index
    %2 = vector.load %arg2[%c0_3, %c0_4] : memref<16x1xf32, #tpu.memory_space<vmem>>, vector<16x1xf32>
    %3 = vector.extract_strided_slice %1 {offsets = [0, 0], sizes = [16, 1], strides = [1, 1]} : vector<16x3xf32> to vector<16x1xf32>
    %4 = vector.extract_strided_slice %0 {offsets = [0, 0], sizes = [1, 256], strides = [1, 1]} : vector<3x256xf32> to vector<1x256xf32>
    %5 = vector.broadcast %3 : vector<16x1xf32> to vector<16x256xf32>
    %6 = vector.broadcast %4 : vector<1x256xf32> to vector<16x256xf32>
    %7 = arith.mulf %5, %6 : vector<16x256xf32>
    %8 = vector.broadcast %2 : vector<16x1xf32> to vector<16x256xf32>
    %9 = arith.addf %8, %7 : vector<16x256xf32>
    %10 = vector.extract_strided_slice %1 {offsets = [0, 1], sizes = [16, 1], strides = [1, 1]} : vector<16x3xf32> to vector<16x1xf32>
    %11 = vector.extract_strided_slice %0 {offsets = [1, 0], sizes = [1, 256], strides = [1, 1]} : vector<3x256xf32> to vector<1x256xf32>
    %12 = vector.broadcast %10 : vector<16x1xf32> to vector<16x256xf32>
    %13 = vector.broadcast %11 : vector<1x256xf32> to vector<16x256xf32>
    %14 = arith.mulf %12, %13 : vector<16x256xf32>
    %15 = arith.addf %9, %14 : vector<16x256xf32>
    %16 = vector.extract_strided_slice %1 {offsets = [0, 2], sizes = [16, 1], strides = [1, 1]} : vector<16x3xf32> to vector<16x1xf32>
    %17 = vector.extract_strided_slice %0 {offsets = [2, 0], sizes = [1, 256], strides = [1, 1]} : vector<3x256xf32> to vector<1x256xf32>
    %18 = vector.broadcast %16 : vector<16x1xf32> to vector<16x256xf32>
    %19 = vector.broadcast %17 : vector<1x256xf32> to vector<16x256xf32>
    %20 = arith.mulf %18, %19 : vector<16x256xf32>
    %21 = arith.addf %15, %20 : vector<16x256xf32>
    %cst = arith.constant 5.000000e-01 : f32
    %22 = vector.broadcast %cst : f32 to vector<16x256xf32>
    %23 = arith.maximumf %21, %22 : vector<16x256xf32>
    %cst_5 = arith.constant 7.500000e-01 : f32
    %24 = vector.broadcast %cst_5 : f32 to vector<16x256xf32>
    %25 = arith.minimumf %23, %24 : vector<16x256xf32>
    %26 = tpu.transpose %25, [1, 0] : vector<16x256xf32> -> vector<256x16xf32>
    %27 = vector.extract_strided_slice %26 {offsets = [0, 0], sizes = [256, 10], strides = [1, 1]} : vector<256x16xf32> to vector<256x10xf32>
    %c0_6 = arith.constant 0 : index
    %c0_7 = arith.constant 0 : index
    %28 = vector.load %arg4[%c0_6, %c0_7] : memref<256x10xf32, #tpu.memory_space<vmem>>, vector<256x10xf32>
    tpu.vector_store %arg4[%c0_6, %c0_7], %27 {strides = array<i32>} : memref<256x10xf32, #tpu.memory_space<vmem>>, vector<256x10xf32>,
    return
  }
  func.func @transform_0(%arg0: i32) -> (i32, i32) {
    %c0_i32 = arith.constant 0 : i32
    %c0_i32_0 = arith.constant 0 : i32
    %c0_i32_1 = arith.constant 0 : i32
    return %c0_i32, %c0_i32_0 : i32, i32
  }
  func.func @transform_1(%arg0: i32) -> (i32, i32) {
    %c0_i32 = arith.constant 0 : i32
    %c0_i32_0 = arith.constant 0 : i32
    %c0_i32_1 = arith.constant 0 : i32
    return %c0_i32, %c0_i32_0 : i32, i32
  }
  func.func @transform_2(%arg0: i32) -> (i32, i32) {
    %c0_i32 = arith.constant 0 : i32
    %c0_i32_0 = arith.constant 0 : i32
    return %c0_i32, %arg0 : i32, i32
  }
  func.func @transform_3(%arg0: i32) -> (i32, i32) {
    %c0_i32 = arith.constant 0 : i32
    %c0_i32_0 = arith.constant 0 : i32
    return %arg0, %c0_i32 : i32, i32
  }
}

</mosaic_0001>

<llo_original>
// kernel: tpu_custom_call.1
$region0: #{tpu_custom_call.1}
  #allocation0 [shape = 'u32[]', space=smem, size = 0x4, offset = 0x4, fixed_abs, tag = 'smem constant byte address 0x4 - core index']
  #allocation1 [shape = 'u32[144,128]{1,0:T(1,128)}', space=vmem, size = 0x12000, scoped, tag = 'internal scratch']
  %s0 = inlined_call_operand.vmem [shape: f32[16,3], index: 0, kind: input, shape index: {}]
  %s1 = inlined_call_operand.vmem [shape: f32[16,1], index: 1, kind: input, shape index: {}]
  %s2 = inlined_call_operand.vmem [shape: f32[3,256], index: 2, kind: input, shape index: {}]
  %s3 = inlined_call_operand.vmem [shape: f32[256,10], index: 3, kind: output, shape index: {}]
  %s4 = sld [smem:[#allocation0]]
  $region22: #{tpu_custom_call.1} parent=0
    _
  %s6 = ssub.s32 1, %s4
  %s7 = scalar_select 0, %s6, %s4
  // Predicated region
  $region2: #{tpu_custom_call.1} parent=0 // pred_check
    _
  $region3: #{tpu_custom_call.1} parent=0 // pred_check_branch
    %9 = sbr.rel (0) target = $region5
  $region4: #{tpu_custom_call.1} parent=0 // pred_region
    _
  $region5: #{tpu_custom_call.1} parent=0 // pred_fallthru
    _
  // Predicated region
  $region6: #{tpu_custom_call.1} parent=0 // pred_check
    _
  $region7: #{tpu_custom_call.1} parent=0 // pred_check_branch
    %11 = sbr.rel (0) target = $region9
  $region8: #{tpu_custom_call.1} parent=0 // pred_region
    _
  $region9: #{tpu_custom_call.1} parent=0 // pred_fallthru
    _
  // Predicated region
  $region10: #{tpu_custom_call.1} parent=0 // pred_check
    _
  $region11: #{tpu_custom_call.1} parent=0 // pred_check_branch
    %13 = sbr.rel (0) target = $region13
  $region12: #{tpu_custom_call.1} parent=0 // pred_region
    _
  $region13: #{tpu_custom_call.1} parent=0 // pred_fallthru
    _
  %v14 = vld [vmem:[%s2] sm:$0x77]
  %v15 = vld [vmem:[%s0] sm:$0xff]
  %v16 = vld [vmem:[%s0 + $0x8] sm:$0xff]
  %v17 = vld [vmem:[%s1] sm:$0xff]
  %v18 = vld [vmem:[%s1 + $0x8] sm:$0xff]
  %20 = vset.pattern.permute.xlu0 0
  %21 = vperm.xlu0 %20, %v15
  %v22 = vpop.permute.xlu0 %21
  %25 = vset.pattern.permute.xlu0 0
  %26 = vperm.xlu0 %25, %v16
  %v27 = vpop.permute.xlu0 %26
  %v30 = vlaneseq
  %v31 = vshrl.u32 %v30, 7
  %v32 = vsub.s32 0, %v31
  %v33 = vrot.slane %v14, %v32
  %v34 = vlaneseq
  %v35 = vshrl.u32 %v34, 7
  %v36 = vsub.s32 4, %v35
  %v37 = vrot.slane %v14, %v36
  %v40 = vlaneseq
  %v41 = vshrl.u32 %v40, 7
  %v42 = vsub.s32 0, %v41
  %v43 = vrot.slane %v33, %v42
  %v44 = vlaneseq
  %v45 = vshrl.u32 %v44, 7
  %v46 = vsub.s32 0, %v45
  %v47 = vrot.slane %v37, %v46
  %v48 = vmul.f32 %v22, %v43
  %v49 = vmul.f32 %v22, %v47
  %v50 = vmul.f32 %v27, %v43
  %v51 = vmul.f32 %v27, %v47
  %53 = vset.pattern.permute.xlu0 0
  %54 = vperm.xlu0 %53, %v17
  %v55 = vpop.permute.xlu0 %54
  %58 = vset.pattern.permute.xlu0 0
  %59 = vperm.xlu0 %58, %v18
  %v60 = vpop.permute.xlu0 %59
  %v62 = vadd.f32 %v55, %v48
  %v63 = vadd.f32 %v55, %v49
  %v64 = vadd.f32 %v60, %v50
  %v65 = vadd.f32 %v60, %v51
  %66 = vset.pattern.permute.xlu0 1
  %67 = vperm.xlu0 %66, %v15
  %v68 = vpop.permute.xlu0 %67
  %70 = vset.pattern.permute.xlu0 1
  %71 = vperm.xlu0 %70, %v16
  %v72 = vpop.permute.xlu0 %71
  %v74 = vlaneseq
  %v75 = vshrl.u32 %v74, 7
  %v76 = vsub.s32 1, %v75
  %v77 = vrot.slane %v14, %v76
  %v78 = vlaneseq
  %v79 = vshrl.u32 %v78, 7
  %v80 = vsub.s32 5, %v79
  %v81 = vrot.slane %v14, %v80
  %v84 = vlaneseq
  %v85 = vshrl.u32 %v84, 7
  %v86 = vsub.s32 1, %v85
  %v87 = vrot.slane %v77, %v86
  %v88 = vlaneseq
  %v89 = vshrl.u32 %v88, 7
  %v90 = vsub.s32 1, %v89
  %v91 = vrot.slane %v81, %v90
  %v92 = vmul.f32 %v68, %v87
  %v93 = vmul.f32 %v68, %v91
  %v94 = vmul.f32 %v72, %v87
  %v95 = vmul.f32 %v72, %v91
  %v96 = vadd.f32 %v62, %v92
  %v97 = vadd.f32 %v63, %v93
  %v98 = vadd.f32 %v64, %v94
  %v99 = vadd.f32 %v65, %v95
  %100 = vset.pattern.permute.xlu0 2
  %101 = vperm.xlu0 %100, %v15
  %v102 = vpop.permute.xlu0 %101
  %104 = vset.pattern.permute.xlu0 2
  %105 = vperm.xlu0 %104, %v16
  %v106 = vpop.permute.xlu0 %105
  %v108 = vlaneseq
  %v109 = vshrl.u32 %v108, 7
  %v110 = vsub.s32 2, %v109
  %v111 = vrot.slane %v14, %v110
  %v112 = vlaneseq
  %v113 = vshrl.u32 %v112, 7
  %v114 = vsub.s32 6, %v113
  %v115 = vrot.slane %v14, %v114
  %v118 = vlaneseq
  %v119 = vshrl.u32 %v118, 7
  %v120 = vsub.s32 2, %v119
  %v121 = vrot.slane %v111, %v120
  %v122 = vlaneseq
  %v123 = vshrl.u32 %v122, 7
  %v124 = vsub.s32 2, %v123
  %v125 = vrot.slane %v115, %v124
  %v126 = vmul.f32 %v102, %v121
  %v127 = vmul.f32 %v102, %v125
  %v128 = vmul.f32 %v106, %v121
  %v129 = vmul.f32 %v106, %v125
  %v130 = vadd.f32 %v96, %v126
  %v131 = vadd.f32 %v97, %v127
  %v132 = vadd.f32 %v98, %v128
  %v133 = vadd.f32 %v99, %v129
  %v134 = vmax.f32 %v130, 0.5
  %v135 = vmax.f32 %v131, 0.5
  %v136 = vmax.f32 %v132, 0.5
  %v137 = vmax.f32 %v133, 0.5
  %v138 = vmin.f32 %v134, 0.75
  %v139 = vmin.f32 %v135, 0.75
  %v140 = vmin.f32 %v136, 0.75
  %v141 = vmin.f32 %v137, 0.75
  %142 = vxpose.xlu0.b32.start [1/16] %v138, 128
  %143 = vxpose.xlu0.b32.cont [2/16] %v140, 128
  %144 = vxpose.xlu0.b32.cont [3/16] 0.0, 128
  %145 = vxpose.xlu0.b32.cont [4/16] 0.0, 128
  %146 = vxpose.xlu0.b32.cont [5/16] 0.0, 128
  %147 = vxpose.xlu0.b32.cont [6/16] 0.0, 128
  %148 = vxpose.xlu0.b32.cont [7/16] 0.0, 128
  %149 = vxpose.xlu0.b32.cont [8/16] 0.0, 128
  %150 = vxpose.xlu0.b32.cont [9/16] 0.0, 128
  %151 = vxpose.xlu0.b32.cont [10/16] 0.0, 128
  %152 = vxpose.xlu0.b32.cont [11/16] 0.0, 128
  %153 = vxpose.xlu0.b32.cont [12/16] 0.0, 128
  %154 = vxpose.xlu0.b32.cont [13/16] 0.0, 128
  %155 = vxpose.xlu0.b32.cont [14/16] 0.0, 128
  %156 = vxpose.xlu0.b32.cont [15/16] 0.0, 128
  %157 = vxpose.xlu0.b32.end [16/16] 0.0, 128
  %v158 = vpop.trf.xlu0
  %v159 = vpop.trf.xlu0
  %v160 = vpop.trf.xlu0
  %v161 = vpop.trf.xlu0
  %v162 = vpop.trf.xlu0
  %v163 = vpop.trf.xlu0
  %v164 = vpop.trf.xlu0
  %v165 = vpop.trf.xlu0
  %v166 = vpop.trf.xlu0
  %v167 = vpop.trf.xlu0
  %v168 = vpop.trf.xlu0
  %v169 = vpop.trf.xlu0
  %v170 = vpop.trf.xlu0
  %v171 = vpop.trf.xlu0
  %v172 = vpop.trf.xlu0
  %v173 = vpop.trf.xlu0
  %174 = vxpose.xlu0.b32.start [1/16] %v139, 128
  %175 = vxpose.xlu0.b32.cont [2/16] %v141, 128
  %176 = vxpose.xlu0.b32.cont [3/16] 0.0, 128
  %177 = vxpose.xlu0.b32.cont [4/16] 0.0, 128
  %178 = vxpose.xlu0.b32.cont [5/16] 0.0, 128
  %179 = vxpose.xlu0.b32.cont [6/16] 0.0, 128
  %180 = vxpose.xlu0.b32.cont [7/16] 0.0, 128
  %181 = vxpose.xlu0.b32.cont [8/16] 0.0, 128
  %182 = vxpose.xlu0.b32.cont [9/16] 0.0, 128
  %183 = vxpose.xlu0.b32.cont [10/16] 0.0, 128
  %184 = vxpose.xlu0.b32.cont [11/16] 0.0, 128
  %185 = vxpose.xlu0.b32.cont [12/16] 0.0, 128
  %186 = vxpose.xlu0.b32.cont [13/16] 0.0, 128
  %187 = vxpose.xlu0.b32.cont [14/16] 0.0, 128
  %188 = vxpose.xlu0.b32.cont [15/16] 0.0, 128
  %189 = vxpose.xlu0.b32.end [16/16] 0.0, 128
  %v190 = vpop.trf.xlu0
  %v191 = vpop.trf.xlu0
  %v192 = vpop.trf.xlu0
  %v193 = vpop.trf.xlu0
  %v194 = vpop.trf.xlu0
  %v195 = vpop.trf.xlu0
  %v196 = vpop.trf.xlu0
  %v197 = vpop.trf.xlu0
  %v198 = vpop.trf.xlu0
  %v199 = vpop.trf.xlu0
  %v200 = vpop.trf.xlu0
  %v201 = vpop.trf.xlu0
  %v202 = vpop.trf.xlu0
  %v203 = vpop.trf.xlu0
  %v204 = vpop.trf.xlu0
  %v205 = vpop.trf.xlu0
  %vm206 = vcmask 80896
  %207 = vst.msk [vmem:[%s3] sm:$0xff] %vm206, %v158
  %208 = vst.msk [vmem:[%s3 + $0x8] sm:$0xff] %vm206, %v159
  %209 = vst.msk [vmem:[%s3 + $0x10] sm:$0xff] %vm206, %v160
  %210 = vst.msk [vmem:[%s3 + $0x18] sm:$0xff] %vm206, %v161
  %211 = vst.msk [vmem:[%s3 + $0x20] sm:$0xff] %vm206, %v162
  %212 = vst.msk [vmem:[%s3 + $0x28] sm:$0xff] %vm206, %v163
  %213 = vst.msk [vmem:[%s3 + $0x30] sm:$0xff] %vm206, %v164
  %214 = vst.msk [vmem:[%s3 + $0x38] sm:$0xff] %vm206, %v165
  %215 = vst.msk [vmem:[%s3 + $0x40] sm:$0xff] %vm206, %v166
  %216 = vst.msk [vmem:[%s3 + $0x48] sm:$0xff] %vm206, %v167
  %217 = vst.msk [vmem:[%s3 + $0x50] sm:$0xff] %vm206, %v168
  %218 = vst.msk [vmem:[%s3 + $0x58] sm:$0xff] %vm206, %v169
  %219 = vst.msk [vmem:[%s3 + $0x60] sm:$0xff] %vm206, %v170
  %220 = vst.msk [vmem:[%s3 + $0x68] sm:$0xff] %vm206, %v171
  %221 = vst.msk [vmem:[%s3 + $0x70] sm:$0xff] %vm206, %v172
  %222 = vst.msk [vmem:[%s3 + $0x78] sm:$0xff] %vm206, %v173
  %223 = vst.msk [vmem:[%s3 + $0x80] sm:$0xff] %vm206, %v190
  %224 = vst.msk [vmem:[%s3 + $0x88] sm:$0xff] %vm206, %v191
  %225 = vst.msk [vmem:[%s3 + $0x90] sm:$0xff] %vm206, %v192
  %226 = vst.msk [vmem:[%s3 + $0x98] sm:$0xff] %vm206, %v193
  %227 = vst.msk [vmem:[%s3 + $0xa0] sm:$0xff] %vm206, %v194
  %228 = vst.msk [vmem:[%s3 + $0xa8] sm:$0xff] %vm206, %v195
  %229 = vst.msk [vmem:[%s3 + $0xb0] sm:$0xff] %vm206, %v196
  %230 = vst.msk [vmem:[%s3 + $0xb8] sm:$0xff] %vm206, %v197
  %231 = vst.msk [vmem:[%s3 + $0xc0] sm:$0xff] %vm206, %v198
  %232 = vst.msk [vmem:[%s3 + $0xc8] sm:$0xff] %vm206, %v199
  %233 = vst.msk [vmem:[%s3 + $0xd0] sm:$0xff] %vm206, %v200
  %234 = vst.msk [vmem:[%s3 + $0xd8] sm:$0xff] %vm206, %v201
  %235 = vst.msk [vmem:[%s3 + $0xe0] sm:$0xff] %vm206, %v202
  %236 = vst.msk [vmem:[%s3 + $0xe8] sm:$0xff] %vm206, %v203
  %237 = vst.msk [vmem:[%s3 + $0xf0] sm:$0xff] %vm206, %v204
  %238 = vst.msk [vmem:[%s3 + $0xf8] sm:$0xff] %vm206, %v205
  // Predicated region
  $region14: #{tpu_custom_call.1} parent=0 // pred_check
    _
  $region15: #{tpu_custom_call.1} parent=0 // pred_check_branch
    %240 = sbr.rel (0) target = $region17
  $region16: #{tpu_custom_call.1} parent=0 // pred_region
    _
  $region17: #{tpu_custom_call.1} parent=0 // pred_fallthru
    _
  // Predicated region
  $region18: #{tpu_custom_call.1} parent=0 // pred_check
    _
  $region19: #{tpu_custom_call.1} parent=0 // pred_check_branch
    %242 = sbr.rel (0) target = $region21
  $region20: #{tpu_custom_call.1} parent=0 // pred_region
    _
  $region21: #{tpu_custom_call.1} parent=0 // pred_fallthru
    _

</llo_original>
